<compile_context>
chip_gen: v7x
topology: tpu7x:2x2x1
jax: 0.10.0
libtpu: 0.0.40
codegen_flags: <defaults>
</compile_context>

<pallas_src>
import math
import jax
import jax.numpy as jnp
from jax.experimental import pallas as pl
from jax.experimental.pallas import tpu as pltpu


def _mamba_embed_kernel(v_ref, ind_ref, dt_ref, bias_ref,
                        w_time_ref, phi_ref,
                        w_x_ref, w_t_ref,
                        gamma_ref, beta_ref,
                        out_ref):
    # One grid step == one (batch, row-tile) slab of the flat (B*T, F) view.
    v = v_ref[0]                                               # (tT, F)
    x = v * ind_ref[0].astype(v.dtype)                         # masked values
    delta = dt_ref[0]                                          # (tT, 1)

    # ---- TimeEmbeddingLayer: sin(delta * w + phi) ----
    time_emb = jnp.sin(delta * w_time_ref[...] + phi_ref[...])  # (tT, MT) f32

    # ---- fused (ConceptEmbedding -> scale_layer) + StaticEmbedding bias ----
    #   z = x @ (w_fc @ w_scale_f) + time_emb @ w_scale_t + fused_bias[b]
    # Two small-K MXU dots (K=F, K=MT), f32 accumulate; no in-kernel operand
    # downcasts (bf16, if any, happens at the HBM boundary in the wrapper).
    w_x = w_x_ref[...]
    w_t = w_t_ref[...]
    z = (jnp.dot(x, w_x, preferred_element_type=jnp.float32)
         + jnp.dot(time_emb.astype(w_t.dtype), w_t,
                   preferred_element_type=jnp.float32)
         + bias_ref[0])                                        # (tT, E) f32

    # ---- tanh -> LayerNorm(eps=1e-12) -> dropout (identity) ----
    comb = jnp.tanh(z)
    inv_e = 1.0 / comb.shape[-1]                               # hoisted constant
    s1 = jnp.sum(comb, axis=-1, keepdims=True)
    s2 = jnp.sum(comb * comb, axis=-1, keepdims=True)          # fused single pass
    mean = s1 * inv_e
    var = jnp.maximum(s2 * inv_e - mean * mean, 0.0)           # biased var (PyTorch LN)
    normed = (comb - mean) * jax.lax.rsqrt(var + 1e-12)
    out_ref[0] = (normed * gamma_ref[...] + beta_ref[...]).astype(out_ref.dtype)


def _vmem_limit_bytes():
    """Generation-appropriate VMEM budget: 96 MiB on 128-MiB parts (v5e/v6e),
    48 MiB on the 64-MiB v7x; conservative 48 MiB if the query is unavailable."""
    phys = 64 * 1024 * 1024
    try:
        info = pltpu.get_tpu_info()
        phys = int(getattr(info, "vmem_capacity_bytes", phys))
    except Exception:
        pass
    return min(phys * 3 // 4, 96 * 1024 * 1024)


def _pick_row_tile(T, per_row_io_bytes, per_row_tmp_bytes, vmem_limit):
    """Largest row tile that divides T and keeps the per-step footprint
    (double-buffered I/O + f32 temporaries) within ~half the VMEM budget."""
    budget = vmem_limit // 2
    for t in (8192, 4096, 2048, 1024, 512, 256, 128):
        if T % t == 0 and t * (2 * per_row_io_bytes + per_row_tmp_bytes) <= budget:
            return t
    return T          # small / ragged T: take the whole axis in one block


def _maybe_buffered_spec(shape, index_map, buffer_count):
    """BlockSpec with explicit pipeline depth; falls back to the default
    double-buffered spec if pipeline_mode is not supported."""
    if buffer_count is not None and buffer_count != 2:
        try:
            return pl.BlockSpec(shape, index_map,
                                pipeline_mode=pl.Buffered(buffer_count))
        except TypeError:
            pass
    return pl.BlockSpec(shape, index_map)


def mamba_embedding_forward(ts_values, ts_indicators, ts_times, static, params,
                            out_dtype=jnp.float32, input_buffers=2):
    """ts_values: (B, F, T) float; ts_indicators: (B, F, T) int8/float mask;
    ts_times: (B, T); static: (B, S).  Returns (B, T, E) in out_dtype."""
    B, F, T = ts_values.shape
    E = params["w_fc"].shape[1]
    MT = params["w_time"].shape[1]

    vmem_limit = _vmem_limit_bytes()
    single_buffer_consts = vmem_limit <= 48 * 1024 * 1024   # v7x-class headroom

    per_row_io = (F * ts_values.dtype.itemsize
                  + F * ts_indicators.dtype.itemsize
                  + 4                                        # delta
                  + E * jnp.dtype(out_dtype).itemsize)
    per_row_tmp = 4 * MT + 12 * E                            # time_emb + z/comb f32
    tT = _pick_row_tile(T, per_row_io, per_row_tmp, vmem_limit)

    # -- wrapper glue (free views / tiny one-off XLA work) --------------------
    # PyTorch-equivalent flat row-major regroup (B,F,T)->(B,T,F): a pure view of
    # the contiguous buffer (NOT a permute), matching inputs.reshape(-1, F).
    v3 = ts_values.reshape(B, T, F)
    i3 = ts_indicators.reshape(B, T, F)                      # kept in caller dtype (int8 ok)

    # is_time_delta=True -> [0, t1-t0, t2-t1, ...], pre-shaped (B, T, 1).
    delta = jnp.concatenate(
        [jnp.zeros((B, 1), ts_times.dtype), ts_times[:, 1:] - ts_times[:, :-1]],
        axis=-1)[..., None]

    # Algebraic fusion of the Linear chain (identical math up to fp rounding):
    #   w_fused = w_fc @ w_scale_f ;  bias[b] = b_fc@w_scale_f + b_scale
    #                                           + static[b]@w_static + b_static
    wdt = ts_values.dtype
    w_fused = (params["w_fc"] @ params["w_scale_f"]).astype(wdt)        # (F, E)
    w_t = params["w_scale_t"].astype(wdt)                               # (MT, E)
    bias = (params["b_fc"] @ params["w_scale_f"] + params["b_scale"]
            + static @ params["w_static"] + params["b_static"])         # (B, E)
    bias = bias.astype(jnp.float32)[:, None, :]                         # (B, 1, E)

    const_buffers = 1 if single_buffer_consts else None
    const2d = lambda shape: _maybe_buffered_spec(shape, lambda b, t: (0, 0),
                                                 const_buffers)
    stream = lambda shape: _maybe_buffered_spec(shape, lambda b, t: (b, t, 0),
                                                input_buffers)

    grid_spec = pltpu.PrefetchScalarGridSpec(
        num_scalar_prefetch=0,
        grid=(B, T // tT),
        in_specs=[
            stream((1, tT, F)),                                  # ts_values (flat view)
            stream((1, tT, F)),                                  # ts_indicators (int8)
            pl.BlockSpec((1, tT, 1), lambda b, t: (b, t, 0)),    # delta (B,T,1)
            pl.BlockSpec((1, 1, E), lambda b, t: (b, 0, 0)),     # fused per-batch bias
            const2d((1, MT)),                                    # w_time
            const2d((1, MT)),                                    # phi
            const2d((F, E)),                                     # w_fused = w_fc @ w_scale_f
            const2d((MT, E)),                                    # w_scale_t
            const2d((1, E)),                                     # LN gamma
            const2d((1, E)),                                     # LN beta
        ],
        out_specs=pl.BlockSpec((1, tT, E), lambda b, t: (b, t, 0)),
    )

    return pl.pallas_call(
        _mamba_embed_kernel,
        out_shape=jax.ShapeDtypeStruct((B, T, E), out_dtype),
        grid_spec=grid_spec,
        compiler_params=pltpu.CompilerParams(
            dimension_semantics=("parallel", "parallel"),
            vmem_limit_bytes=vmem_limit),
    )(v3, i3, delta, bias,
      params["w_time"], params["phi"],
      w_fused, w_t,
      params["gamma"], params["beta"])


def init_params(key, num_features, static_size, max_time_steps, hidden_size):
    """Deterministic init matching the PyTorch module's parameter shapes.
    Linear weights stored transposed (in, out) for x @ W."""
    F, S, MT, E = num_features, static_size, max_time_steps, hidden_size
    ks = jax.random.split(key, 10)
    u = lambda k, shape, bound: jax.random.uniform(
        k, shape, jnp.float32, minval=-bound, maxval=bound)

    xavier = math.sqrt(6.0 / (1 + MT))
    scale_in = E + MT
    w_scale_full = u(ks[4], (scale_in, E), 1.0 / math.sqrt(scale_in))

    return {
        # TimeEmbeddingLayer
        "w_time": u(ks[0], (1, MT), xavier),
        "phi":    u(ks[1], (1, MT), xavier),
        # ConceptEmbedding.fc : Linear(F, E)
        "w_fc": u(ks[2], (F, E), 1.0 / math.sqrt(F)),
        "b_fc": u(ks[3], (1, E), 1.0 / math.sqrt(F)),
        # scale_layer : Linear(E + MT, E), split into feature / time halves
        "w_scale_f": w_scale_full[:E, :],
        "w_scale_t": w_scale_full[E:, :],
        "b_scale":   u(ks[5], (1, E), 1.0 / math.sqrt(scale_in)),
        # StaticEmbedding.fc : Linear(S, E)
        "w_static": u(ks[6], (S, E), 1.0 / math.sqrt(S)),
        "b_static": u(ks[7], (1, E), 1.0 / math.sqrt(S)),
        # LayerNorm(E)
        "gamma": jnp.ones((1, E), jnp.float32),
        "beta":  jnp.zeros((1, E), jnp.float32),
        # TODO(synk): scale_back_concat_layer is unused in forward(); omitted.
    }


def reference_forward(ts_values, ts_indicators, ts_times, static, params):
    """Pure-JAX reference reproducing the PyTorch forward (eval mode), unfused."""
    B, F, T = ts_values.shape
    E = params["w_fc"].shape[1]
    masked = ts_values * ts_indicators.astype(ts_values.dtype)
    feat = masked.reshape(-1, F) @ params["w_fc"] + params["b_fc"]
    feat = feat.reshape(B, T, E)
    delta = jnp.concatenate(
        [jnp.zeros((B, 1), ts_times.dtype), ts_times[:, 1:] - ts_times[:, :-1]], -1)
    time_emb = jnp.sin(delta[..., None] * params["w_time"] + params["phi"])
    w_scale = jnp.concatenate([params["w_scale_f"], params["w_scale_t"]], 0)
    ts_emb = jnp.concatenate([feat, time_emb], -1) @ w_scale + params["b_scale"]
    static_emb = static @ params["w_static"] + params["b_static"]
    comb = jnp.tanh(ts_emb + static_emb[:, None, :])
    mean = comb.mean(-1, keepdims=True)
    var = ((comb - mean) ** 2).mean(-1, keepdims=True)
    return (comb - mean) / jnp.sqrt(var + 1e-12) * params["gamma"] + params["beta"]


if __name__ == "__main__":
    B, F, T = 2, 8, 8          # batch, num_features, time_steps
    MT = 16                    # max_time_steps (time embedding width)
    E = 128                    # hidden_size (lane-aligned; mamba-130m uses 768)
    S = 4                      # static_size

    key = jax.random.PRNGKey(0)
    k_in, k_p = jax.random.split(key)
    k1, k2, k3, k4 = jax.random.split(k_in, 4)

    ts_values = jax.random.normal(k1, (B, F, T), jnp.float32)
    # int8 mask stream (review item): 0/1 indicators cast in-kernel, exact math.
    ts_indicators = (jax.random.uniform(k2, (B, F, T)) > 0.3).astype(jnp.int8)
    ts_times = jnp.cumsum(jax.random.uniform(k3, (B, T), jnp.float32), axis=-1)
    static = jax.random.normal(k4, (B, S), jnp.float32)

    params = init_params(k_p, F, S, MT, E)

    out = mamba_embedding_forward(ts_values, ts_indicators, ts_times, static, params)
    out = jax.block_until_ready(out)

    ref = reference_forward(ts_values, ts_indicators, ts_times, static, params)
    assert out.shape == (B, T, E), out.shape
    assert jnp.allclose(out, ref, rtol=1e-4, atol=1e-4), "mismatch vs reference"
    print("KERNEL_OK")
</pallas_src>

<mosaic_0001>
module attributes {stable_mosaic.version = 11 : i64} {
  func.func @_mamba_embed_kernel(%arg0: i32, %arg1: i32, %arg2: memref<1x8x8xf32, #tpu.memory_space<vmem>>, %arg3: memref<1x8x8xi8, #tpu.memory_space<vmem>>, %arg4: memref<1x8x1xf32, #tpu.memory_space<vmem>>, %arg5: memref<1x1x128xf32, #tpu.memory_space<vmem>>, %arg6: memref<1x16xf32, #tpu.memory_space<vmem>>, %arg7: memref<1x16xf32, #tpu.memory_space<vmem>>, %arg8: memref<8x128xf32, #tpu.memory_space<vmem>>, %arg9: memref<16x128xf32, #tpu.memory_space<vmem>>, %arg10: memref<1x128xf32, #tpu.memory_space<vmem>>, %arg11: memref<1x128xf32, #tpu.memory_space<vmem>>, %arg12: memref<1x8x128xf32, #tpu.memory_space<vmem>>) attributes {dimension_semantics = [#tpu.dimension_semantics<parallel>, #tpu.dimension_semantics<parallel>], iteration_bounds = array<i64: 2, 1>, scalar_prefetch = 0 : i64, scratch_operands = 0 : i64, tpu.core_type = #tpu.core_type<tc>, window_params = [{transform_indices = @transform_0, window_bounds = array<i64: 1, 8, 8>}, {transform_indices = @transform_1, window_bounds = array<i64: 1, 8, 8>}, {transform_indices = @transform_2, window_bounds = array<i64: 1, 8, 1>}, {transform_indices = @transform_3, window_bounds = array<i64: 1, 1, 128>}, {pipeline_mode = #tpu.pipeline_mode<synchronous>, transform_indices = @transform_4, window_bounds = array<i64: 1, 16>}, {pipeline_mode = #tpu.pipeline_mode<synchronous>, transform_indices = @transform_5, window_bounds = array<i64: 1, 16>}, {pipeline_mode = #tpu.pipeline_mode<synchronous>, transform_indices = @transform_6, window_bounds = array<i64: 8, 128>}, {pipeline_mode = #tpu.pipeline_mode<synchronous>, transform_indices = @transform_7, window_bounds = array<i64: 16, 128>}, {pipeline_mode = #tpu.pipeline_mode<synchronous>, transform_indices = @transform_8, window_bounds = array<i64: 1, 128>}, {pipeline_mode = #tpu.pipeline_mode<synchronous>, transform_indices = @transform_9, window_bounds = array<i64: 1, 128>}, {transform_indices = @transform_10, window_bounds = array<i64: 1, 8, 128>}]} {
    %c0 = arith.constant 0 : index
    %c0_0 = arith.constant 0 : index
    %c0_1 = arith.constant 0 : index
    %0 = vector.load %arg2[%c0, %c0_0, %c0_1] : memref<1x8x8xf32, #tpu.memory_space<vmem>>, vector<1x8x8xf32>
    %1 = vector.shape_cast %0 : vector<1x8x8xf32> to vector<8x8xf32>
    %c0_2 = arith.constant 0 : index
    %c0_3 = arith.constant 0 : index
    %c0_4 = arith.constant 0 : index
    %2 = vector.load %arg3[%c0_2, %c0_3, %c0_4] : memref<1x8x8xi8, #tpu.memory_space<vmem>>, vector<1x8x8xi8>
    %3 = vector.shape_cast %2 : vector<1x8x8xi8> to vector<8x8xi8>
    %4 = arith.sitofp %3 : vector<8x8xi8> to vector<8x8xf32>
    %5 = arith.mulf %1, %4 : vector<8x8xf32>
    %c0_5 = arith.constant 0 : index
    %c0_6 = arith.constant 0 : index
    %c0_7 = arith.constant 0 : index
    %6 = vector.load %arg4[%c0_5, %c0_6, %c0_7] : memref<1x8x1xf32, #tpu.memory_space<vmem>>, vector<1x8x1xf32>
    %7 = vector.shape_cast %6 : vector<1x8x1xf32> to vector<8x1xf32>
    %c0_8 = arith.constant 0 : index
    %c0_9 = arith.constant 0 : index
    %8 = vector.load %arg6[%c0_8, %c0_9] : memref<1x16xf32, #tpu.memory_space<vmem>>, vector<1x16xf32>
    %9 = vector.broadcast %7 : vector<8x1xf32> to vector<8x16xf32>
    %10 = vector.broadcast %8 : vector<1x16xf32> to vector<8x16xf32>
    %11 = arith.mulf %9, %10 : vector<8x16xf32>
    %c0_10 = arith.constant 0 : index
    %c0_11 = arith.constant 0 : index
    %12 = vector.load %arg7[%c0_10, %c0_11] : memref<1x16xf32, #tpu.memory_space<vmem>>, vector<1x16xf32>
    %13 = vector.broadcast %12 : vector<1x16xf32> to vector<8x16xf32>
    %14 = arith.addf %11, %13 : vector<8x16xf32>
    %15 = math.sin %14 : vector<8x16xf32>
    %c0_12 = arith.constant 0 : index
    %c0_13 = arith.constant 0 : index
    %16 = vector.load %arg8[%c0_12, %c0_13] : memref<8x128xf32, #tpu.memory_space<vmem>>, vector<8x128xf32>
    %c0_14 = arith.constant 0 : index
    %c0_15 = arith.constant 0 : index
    %17 = vector.load %arg9[%c0_14, %c0_15] : memref<16x128xf32, #tpu.memory_space<vmem>>, vector<16x128xf32>
    %cst = arith.constant dense<0.000000e+00> : vector<8x128xf32>
    %18 = tpu.matmul %5, %16, %cst {dimension_numbers = #tpu.dot_dimension_numbers<[1], [0], [0], [1], [0, 0, 1, 1], [], []>} : vector<8x8xf32>, vector<8x128xf32>, vector<8x128xf32> -> vector<8x128xf32>
    %cst_16 = arith.constant dense<0.000000e+00> : vector<8x128xf32>
    %19 = tpu.matmul %15, %17, %cst_16 {dimension_numbers = #tpu.dot_dimension_numbers<[1], [0], [0], [1], [0, 0, 1, 1], [], []>} : vector<8x16xf32>, vector<16x128xf32>, vector<8x128xf32> -> vector<8x128xf32>
    %20 = arith.addf %18, %19 : vector<8x128xf32>
    %c0_17 = arith.constant 0 : index
    %c0_18 = arith.constant 0 : index
    %c0_19 = arith.constant 0 : index
    %21 = vector.load %arg5[%c0_17, %c0_18, %c0_19] : memref<1x1x128xf32, #tpu.memory_space<vmem>>, vector<1x1x128xf32>
    %22 = vector.shape_cast %21 : vector<1x1x128xf32> to vector<1x128xf32>
    %23 = vector.broadcast %22 : vector<1x128xf32> to vector<8x128xf32>
    %24 = arith.addf %20, %23 : vector<8x128xf32>
    %25 = math.tanh %24 : vector<8x128xf32>
    %cst_20 = arith.constant dense<0.000000e+00> : vector<8xf32>
    %26 = vector.multi_reduction <add>, %25, %cst_20 [1] : vector<8x128xf32> to vector<8xf32>
    %27 = vector.shape_cast %26 : vector<8xf32> to vector<8x1xf32>
    %28 = arith.mulf %25, %25 : vector<8x128xf32>
    %cst_21 = arith.constant dense<0.000000e+00> : vector<8xf32>
    %29 = vector.multi_reduction <add>, %28, %cst_21 [1] : vector<8x128xf32> to vector<8xf32>
    %30 = vector.shape_cast %29 : vector<8xf32> to vector<8x1xf32>
    %cst_22 = arith.constant 7.812500e-03 : f32
    %31 = vector.broadcast %cst_22 : f32 to vector<8x1xf32>
    %32 = arith.mulf %27, %31 : vector<8x1xf32>
    %cst_23 = arith.constant 7.812500e-03 : f32
    %33 = vector.broadcast %cst_23 : f32 to vector<8x1xf32>
    %34 = arith.mulf %30, %33 : vector<8x1xf32>
    %35 = arith.mulf %32, %32 : vector<8x1xf32>
    %36 = arith.subf %34, %35 : vector<8x1xf32>
    %cst_24 = arith.constant 0.000000e+00 : f32
    %37 = vector.broadcast %cst_24 : f32 to vector<8x1xf32>
    %38 = arith.maximumf %36, %37 : vector<8x1xf32>
    %39 = vector.broadcast %32 : vector<8x1xf32> to vector<8x128xf32>
    %40 = arith.subf %25, %39 : vector<8x128xf32>
    %cst_25 = arith.constant 9.99999996E-13 : f32
    %41 = vector.broadcast %cst_25 : f32 to vector<8x1xf32>
    %42 = arith.addf %38, %41 : vector<8x1xf32>
    %43 = math.rsqrt %42 : vector<8x1xf32>
    %44 = vector.broadcast %43 : vector<8x1xf32> to vector<8x128xf32>
    %45 = arith.mulf %40, %44 : vector<8x128xf32>
    %c0_26 = arith.constant 0 : index
    %c0_27 = arith.constant 0 : index
    %46 = vector.load %arg10[%c0_26, %c0_27] : memref<1x128xf32, #tpu.memory_space<vmem>>, vector<1x128xf32>
    %47 = vector.broadcast %46 : vector<1x128xf32> to vector<8x128xf32>
    %48 = arith.mulf %45, %47 : vector<8x128xf32>
    %c0_28 = arith.constant 0 : index
    %c0_29 = arith.constant 0 : index
    %49 = vector.load %arg11[%c0_28, %c0_29] : memref<1x128xf32, #tpu.memory_space<vmem>>, vector<1x128xf32>
    %50 = vector.broadcast %49 : vector<1x128xf32> to vector<8x128xf32>
    %51 = arith.addf %48, %50 : vector<8x128xf32>
    %c0_30 = arith.constant 0 : index
    %c0_31 = arith.constant 0 : index
    %c0_32 = arith.constant 0 : index
    %52 = vector.load %arg12[%c0_30, %c0_31, %c0_32] : memref<1x8x128xf32, #tpu.memory_space<vmem>>, vector<1x8x128xf32>
    %53 = vector.shape_cast %52 : vector<1x8x128xf32> to vector<8x128xf32>
    %54 = vector.shape_cast %51 : vector<8x128xf32> to vector<1x8x128xf32>
    tpu.vector_store %arg12[%c0_30, %c0_31, %c0_32], %54 {strides = array<i32>} : memref<1x8x128xf32, #tpu.memory_space<vmem>>, vector<1x8x128xf32>,
    return
  }
  func.func @transform_0(%arg0: i32, %arg1: i32) -> (i32, i32, i32) {
    %c0_i32 = arith.constant 0 : i32
    %c0_i32_0 = arith.constant 0 : i32
    return %arg0, %arg1, %c0_i32 : i32, i32, i32
  }
  func.func @transform_1(%arg0: i32, %arg1: i32) -> (i32, i32, i32) {
    %c0_i32 = arith.constant 0 : i32
    %c0_i32_0 = arith.constant 0 : i32
    return %arg0, %arg1, %c0_i32 : i32, i32, i32
  }
  func.func @transform_2(%arg0: i32, %arg1: i32) -> (i32, i32, i32) {
    %c0_i32 = arith.constant 0 : i32
    %c0_i32_0 = arith.constant 0 : i32
    return %arg0, %arg1, %c0_i32 : i32, i32, i32
  }
  func.func @transform_3(%arg0: i32, %arg1: i32) -> (i32, i32, i32) {
    %c0_i32 = arith.constant 0 : i32
    %c0_i32_0 = arith.constant 0 : i32
    %c0_i32_1 = arith.constant 0 : i32
    return %arg0, %c0_i32, %c0_i32_0 : i32, i32, i32
  }
  func.func @transform_4(%arg0: i32, %arg1: i32) -> (i32, i32) {
    %c0_i32 = arith.constant 0 : i32
    %c0_i32_0 = arith.constant 0 : i32
    %c0_i32_1 = arith.constant 0 : i32
    return %c0_i32, %c0_i32_0 : i32, i32
  }
  func.func @transform_5(%arg0: i32, %arg1: i32) -> (i32, i32) {
    %c0_i32 = arith.constant 0 : i32
    %c0_i32_0 = arith.constant 0 : i32
    %c0_i32_1 = arith.constant 0 : i32
    return %c0_i32, %c0_i32_0 : i32, i32
  }
  func.func @transform_6(%arg0: i32, %arg1: i32) -> (i32, i32) {
    %c0_i32 = arith.constant 0 : i32
    %c0_i32_0 = arith.constant 0 : i32
    %c0_i32_1 = arith.constant 0 : i32
    return %c0_i32, %c0_i32_0 : i32, i32
  }
  func.func @transform_7(%arg0: i32, %arg1: i32) -> (i32, i32) {
    %c0_i32 = arith.constant 0 : i32
    %c0_i32_0 = arith.constant 0 : i32
    %c0_i32_1 = arith.constant 0 : i32
    return %c0_i32, %c0_i32_0 : i32, i32
  }
  func.func @transform_8(%arg0: i32, %arg1: i32) -> (i32, i32) {
    %c0_i32 = arith.constant 0 : i32
    %c0_i32_0 = arith.constant 0 : i32
    %c0_i32_1 = arith.constant 0 : i32
    return %c0_i32, %c0_i32_0 : i32, i32
  }
  func.func @transform_9(%arg0: i32, %arg1: i32) -> (i32, i32) {
    %c0_i32 = arith.constant 0 : i32
    %c0_i32_0 = arith.constant 0 : i32
    %c0_i32_1 = arith.constant 0 : i32
    return %c0_i32, %c0_i32_0 : i32, i32
  }
  func.func @transform_10(%arg0: i32, %arg1: i32) -> (i32, i32, i32) {
    %c0_i32 = arith.constant 0 : i32
    %c0_i32_0 = arith.constant 0 : i32
    return %arg0, %arg1, %c0_i32 : i32, i32, i32
  }
}

</mosaic_0001>

<llo_original>
// kernel: tpu_custom_call.1
$region0: #{tpu_custom_call.1}
  #allocation0 [shape = 'u32[]', space=smem, size = 0x4, offset = 0x4, fixed_abs, tag = 'smem constant byte address 0x4 - core index']
  #allocation1 [shape = 'u32[144,128]{1,0:T(1,128)}', space=vmem, size = 0x12000, scoped, tag = 'internal scratch']
  %s0 = inlined_call_operand.vmem [shape: f32[2,8,8], index: 0, kind: input, shape index: {}]
  %s1 = inlined_call_operand.hbm [shape: s8[2,8,8], index: 1, kind: input, shape index: {}]
  %s2 = inlined_call_operand.vmem [shape: f32[2,8,1], index: 2, kind: input, shape index: {}]
  %s3 = inlined_call_operand.hbm [shape: f32[2,1,128], index: 3, kind: input, shape index: {}]
  %s4 = inlined_call_operand.hbm [shape: f32[1,16], index: 4, kind: input, shape index: {}]
  %s5 = inlined_call_operand.hbm [shape: f32[1,16], index: 5, kind: input, shape index: {}]
  %s6 = inlined_call_operand.vmem [shape: f32[8,128], index: 6, kind: input, shape index: {}]
  %s7 = inlined_call_operand.vmem [shape: f32[16,128], index: 7, kind: input, shape index: {}]
  %s8 = inlined_call_operand.vmem [shape: f32[1,128], index: 8, kind: input, shape index: {}]
  %s9 = inlined_call_operand.vmem [shape: f32[1,128], index: 9, kind: input, shape index: {}]
  %s10 = inlined_call_operand.hbm [shape: f32[2,8,128], index: 10, kind: output, shape index: {}]
  %s11 = sld [smem:[#allocation0]]
  $region89: #{tpu_custom_call.1} parent=0
    _
  %s13 = ssub.s32 1, %s11
  %s14 = scalar_select 0, %s13, %s11
  $region1: #{tpu_custom_call.1} parent=0
    #allocation2 [shape = 'u8[2048]{0}', space=vmem, size = 0x800, scoped, tag = 'input window, operand 1']
    #allocation3 [shape = 's32[2]{0}', space=sflag, size = 0x8, scoped, tag = 'scoped memory for tpu_custom_call.1']
    #allocation4 [shape = 's32[2]{0}', space=sflag, size = 0x8, scoped, tag = 'scoped memory for tpu_custom_call.1']
    #allocation5 [shape = 'u8[1024]{0}', space=vmem, size = 0x400, scoped, tag = 'input window, operand 3']
    #allocation6 [shape = 's32[2]{0}', space=sflag, size = 0x8, scoped, tag = 'scoped memory for tpu_custom_call.1']
    #allocation7 [shape = 'u8[512]{0}', space=vmem, size = 0x400, scoped, tag = 'input window, operand 4, single buffered']
    #allocation8 [shape = 'u8[512]{0}', space=vmem, size = 0x400, scoped, tag = 'input window, operand 5, single buffered']
    #allocation9 [shape = 's32[1]{0}', space=sflag, size = 0x4, scoped, tag = 'scoped memory for tpu_custom_call.1']
    #allocation10 [shape = 'u8[8192]{0}', space=vmem, size = 0x2000, scoped, tag = 'output window, operand 0']
    %15 = vsyncpa [#allocation3], 0
    %s16 = scalar_lea.sflag [#allocation3], 1
    %17 = vsyncpa %s16, 0
    %18 = vsyncpa [#allocation6], 0
    %s19 = scalar_lea.sflag [#allocation6], 1
    %20 = vsyncpa %s19, 0
    %21 = vsyncpa [#allocation9], 0
    %22 = vsyncpa [#allocation4], 0
    %s23 = scalar_lea.sflag [#allocation4], 1
    %24 = vsyncpa %s23, 0
    loop: start=0, step=1, limit=4
    $region2: #{tpu_custom_call.1} parent=1 // loop_pre_header
      _
    $region3: #{tpu_custom_call.1} parent=1 // loop_header
      %s26 = sphi 0, %s30
      %p27 = scmp.ge.s32.totalorder %s26, 4
      %s33 = sphi 0, %s45
      %s34 = sphi 0, %s41
      %s35 = sphi 0, %s33
      %s36 = sphi 0, %s34
      %s37 = sphi 0, %s35
      %s38 = sphi 0, %s36
      %s50 = sphi 0, %s52
      %s53 = sphi 0, %s50
      %s54 = sphi 0, %s53
      %s70 = sphi 0, %s54
      %s78 = sphi 0, %s80
      %s81 = sphi 0, %s78
      %s82 = sphi 0, %s81
      %s98 = sphi 0, %s82
      %s106 = sphi 0, %s108
      %s109 = sphi 0, %s106
      %s110 = sphi 0, %s109
      %s126 = sphi 0, %s110
      %s132 = sphi 0, %s134
      %s135 = sphi 0, %s132
      %s136 = sphi 0, %s135
      %s152 = sphi 0, %s136
      %s156 = sphi 0, %s156
      %s158 = sphi 0, %s156
      %s159 = sphi 0, %s158
      %s173 = sphi 0, %s159
      %s177 = sphi 0, %s177
      %s179 = sphi 0, %s177
      %s180 = sphi 0, %s179
      %s194 = sphi 0, %s180
      %s198 = sphi 0, %s198
      %s200 = sphi 0, %s198
      %s201 = sphi 0, %s200
      %s215 = sphi 0, %s201
      %s219 = sphi 0, %s219
      %s221 = sphi 0, %s219
      %s222 = sphi 0, %s221
      %s236 = sphi 0, %s222
      %s240 = sphi 0, %s240
      %s242 = sphi 0, %s240
      %s243 = sphi 0, %s242
      %s257 = sphi 0, %s243
      %s261 = sphi 0, %s261
      %s263 = sphi 0, %s261
      %s264 = sphi 0, %s263
      %s278 = sphi 0, %s264
      %s286 = sphi 0, %s288
      %s289 = sphi 0, %s286
      %s290 = sphi 0, %s289
      %s306 = sphi 0, %s290
    $region4: #{tpu_custom_call.1} parent=1 // loop_header_branch
      %29 = sbr.rel (%p27) target = $region8
    $region5: #{tpu_custom_call.1} parent=1 // loop_body
      %s31 = ssub.s32 %s26, 1
      %s32 = ssub.s32 %s26, 2
      %s39 = sadd.s32 1, %s34
      %p40 = scmp.ge.s32.totalorder %s39, 1
      %s41 = scalar_select %p40, 0, %s39
      %s42 = sadd.s32 1, %s33
      %s43 = scalar_select %p40, %s42, %s33
      %p44 = scmp.ge.s32.totalorder %s43, 2
      %s45 = scalar_select %p44, 0, %s43
      %s46 = ssub.s32 %s33, %s45
      %s47 = ssub.s32 %s34, %s41
      %s48 = sor.u32 %s46, %s47
      %p49 = scmp.eq.s32.totalorder %s48, 0
      %s51 = sadd.s32 %s50, 1
      %s52 = scalar_select %p49, %s50, %s51
      %p55 = pneg %p49
      %p56 = scmp.eq.s32.totalorder %s26, 1
      %p57 = por %p55, %p56
      %p58 = scmp.ne.s32.totalorder %s50, %s53
      %p59 = scmp.eq.s32.totalorder %s26, 0
      %p60 = por %p58, %p59
      %p61 = scmp.ne.s32.totalorder %s50, %s53
      %p62 = scmp.eq.s32.totalorder %s31, 1
      %p63 = por %p61, %p62
      %p64 = scmp.ne.s32.totalorder %s53, %s54
      %p65 = scmp.eq.s32.totalorder %s31, 0
      %p66 = por %p64, %p65
      %p67 = scmp.ne.s32.totalorder %s53, %s54
      %p68 = scmp.eq.s32.totalorder %s32, 1
      %p69 = por %p67, %p68
      %p71 = scmp.ne.s32.totalorder %s54, %s70
      %p72 = scmp.eq.s32.totalorder %s32, 0
      %p73 = por %p71, %p72
      %s74 = ssub.s32 %s33, %s45
      %s75 = ssub.s32 %s34, %s41
      %s76 = sor.u32 %s74, %s75
      %p77 = scmp.eq.s32.totalorder %s76, 0
      %s79 = sadd.s32 %s78, 1
      %s80 = scalar_select %p77, %s78, %s79
      %p83 = pneg %p77
      %p84 = scmp.eq.s32.totalorder %s26, 1
      %p85 = por %p83, %p84
      %p86 = scmp.ne.s32.totalorder %s78, %s81
      %p87 = scmp.eq.s32.totalorder %s26, 0
      %p88 = por %p86, %p87
      %p89 = scmp.ne.s32.totalorder %s78, %s81
      %p90 = scmp.eq.s32.totalorder %s31, 1
      %p91 = por %p89, %p90
      %p92 = scmp.ne.s32.totalorder %s81, %s82
      %p93 = scmp.eq.s32.totalorder %s31, 0
      %p94 = por %p92, %p93
      %p95 = scmp.ne.s32.totalorder %s81, %s82
      %p96 = scmp.eq.s32.totalorder %s32, 1
      %p97 = por %p95, %p96
      %p99 = scmp.ne.s32.totalorder %s82, %s98
      %p100 = scmp.eq.s32.totalorder %s32, 0
      %p101 = por %p99, %p100
      %s102 = ssub.s32 %s33, %s45
      %s103 = ssub.s32 %s34, %s41
      %s104 = sor.u32 %s102, %s103
      %p105 = scmp.eq.s32.totalorder %s104, 0
      %s107 = sadd.s32 %s106, 1
      %s108 = scalar_select %p105, %s106, %s107
      %p111 = pneg %p105
      %p112 = scmp.eq.s32.totalorder %s26, 1
      %p113 = por %p111, %p112
      %p114 = scmp.ne.s32.totalorder %s106, %s109
      %p115 = scmp.eq.s32.totalorder %s26, 0
      %p116 = por %p114, %p115
      %p117 = scmp.ne.s32.totalorder %s106, %s109
      %p118 = scmp.eq.s32.totalorder %s31, 1
      %p119 = por %p117, %p118
      %p120 = scmp.ne.s32.totalorder %s109, %s110
      %p121 = scmp.eq.s32.totalorder %s31, 0
      %p122 = por %p120, %p121
      %p123 = scmp.ne.s32.totalorder %s109, %s110
      %p124 = scmp.eq.s32.totalorder %s32, 1
      %p125 = por %p123, %p124
      %p127 = scmp.ne.s32.totalorder %s110, %s126
      %p128 = scmp.eq.s32.totalorder %s32, 0
      %p129 = por %p127, %p128
      %s130 = ssub.s32 %s33, %s45
      %p131 = scmp.eq.s32.totalorder %s130, 0
      %s133 = sadd.s32 %s132, 1
      %s134 = scalar_select %p131, %s132, %s133
      %p137 = pneg %p131
      %p138 = scmp.eq.s32.totalorder %s26, 1
      %p139 = por %p137, %p138
      %p140 = scmp.ne.s32.totalorder %s132, %s135
      %p141 = scmp.eq.s32.totalorder %s26, 0
      %p142 = por %p140, %p141
      %p143 = scmp.ne.s32.totalorder %s132, %s135
      %p144 = scmp.eq.s32.totalorder %s31, 1
      %p145 = por %p143, %p144
      %p146 = scmp.ne.s32.totalorder %s135, %s136
      %p147 = scmp.eq.s32.totalorder %s31, 0
      %p148 = por %p146, %p147
      %p149 = scmp.ne.s32.totalorder %s135, %s136
      %p150 = scmp.eq.s32.totalorder %s32, 1
      %p151 = por %p149, %p150
      %p153 = scmp.ne.s32.totalorder %s136, %s152
      %p154 = scmp.eq.s32.totalorder %s32, 0
      %p155 = por %p153, %p154
      %s157 = sadd.s32 %s156, 1
      %p160 = scmp.eq.s32.totalorder %s26, 1
      %p161 = scmp.ne.s32.totalorder %s156, %s158
      %p162 = scmp.eq.s32.totalorder %s26, 0
      %p163 = por %p161, %p162
      %p164 = scmp.ne.s32.totalorder %s156, %s158
      %p165 = scmp.eq.s32.totalorder %s31, 1
      %p166 = por %p164, %p165
      %p167 = scmp.ne.s32.totalorder %s158, %s159
      %p168 = scmp.eq.s32.totalorder %s31, 0
      %p169 = por %p167, %p168
      %p170 = scmp.ne.s32.totalorder %s158, %s159
      %p171 = scmp.eq.s32.totalorder %s32, 1
      %p172 = por %p170, %p171
      %p174 = scmp.ne.s32.totalorder %s159, %s173
      %p175 = scmp.eq.s32.totalorder %s32, 0
      %p176 = por %p174, %p175
      %s178 = sadd.s32 %s177, 1
      %p181 = scmp.eq.s32.totalorder %s26, 1
      %p182 = scmp.ne.s32.totalorder %s177, %s179
      %p183 = scmp.eq.s32.totalorder %s26, 0
      %p184 = por %p182, %p183
      %p185 = scmp.ne.s32.totalorder %s177, %s179
      %p186 = scmp.eq.s32.totalorder %s31, 1
      %p187 = por %p185, %p186
      %p188 = scmp.ne.s32.totalorder %s179, %s180
      %p189 = scmp.eq.s32.totalorder %s31, 0
      %p190 = por %p188, %p189
      %p191 = scmp.ne.s32.totalorder %s179, %s180
      %p192 = scmp.eq.s32.totalorder %s32, 1
      %p193 = por %p191, %p192
      %p195 = scmp.ne.s32.totalorder %s180, %s194
      %p196 = scmp.eq.s32.totalorder %s32, 0
      %p197 = por %p195, %p196
      %s199 = sadd.s32 %s198, 1
      %p202 = scmp.eq.s32.totalorder %s26, 1
      %p203 = scmp.ne.s32.totalorder %s198, %s200
      %p204 = scmp.eq.s32.totalorder %s26, 0
      %p205 = por %p203, %p204
      %p206 = scmp.ne.s32.totalorder %s198, %s200
      %p207 = scmp.eq.s32.totalorder %s31, 1
      %p208 = por %p206, %p207
      %p209 = scmp.ne.s32.totalorder %s200, %s201
      %p210 = scmp.eq.s32.totalorder %s31, 0
      %p211 = por %p209, %p210
      %p212 = scmp.ne.s32.totalorder %s200, %s201
      %p213 = scmp.eq.s32.totalorder %s32, 1
      %p214 = por %p212, %p213
      %p216 = scmp.ne.s32.totalorder %s201, %s215
      %p217 = scmp.eq.s32.totalorder %s32, 0
      %p218 = por %p216, %p217
      %s220 = sadd.s32 %s219, 1
      %p223 = scmp.eq.s32.totalorder %s26, 1
      %p224 = scmp.ne.s32.totalorder %s219, %s221
      %p225 = scmp.eq.s32.totalorder %s26, 0
      %p226 = por %p224, %p225
      %p227 = scmp.ne.s32.totalorder %s219, %s221
      %p228 = scmp.eq.s32.totalorder %s31, 1
      %p229 = por %p227, %p228
      %p230 = scmp.ne.s32.totalorder %s221, %s222
      %p231 = scmp.eq.s32.totalorder %s31, 0
      %p232 = por %p230, %p231
      %p233 = scmp.ne.s32.totalorder %s221, %s222
      %p234 = scmp.eq.s32.totalorder %s32, 1
      %p235 = por %p233, %p234
      %p237 = scmp.ne.s32.totalorder %s222, %s236
      %p238 = scmp.eq.s32.totalorder %s32, 0
      %p239 = por %p237, %p238
      %s241 = sadd.s32 %s240, 1
      %p244 = scmp.eq.s32.totalorder %s26, 1
      %p245 = scmp.ne.s32.totalorder %s240, %s242
      %p246 = scmp.eq.s32.totalorder %s26, 0
      %p247 = por %p245, %p246
      %p248 = scmp.ne.s32.totalorder %s240, %s242
      %p249 = scmp.eq.s32.totalorder %s31, 1
      %p250 = por %p248, %p249
      %p251 = scmp.ne.s32.totalorder %s242, %s243
      %p252 = scmp.eq.s32.totalorder %s31, 0
      %p253 = por %p251, %p252
      %p254 = scmp.ne.s32.totalorder %s242, %s243
      %p255 = scmp.eq.s32.totalorder %s32, 1
      %p256 = por %p254, %p255
      %p258 = scmp.ne.s32.totalorder %s243, %s257
      %p259 = scmp.eq.s32.totalorder %s32, 0
      %p260 = por %p258, %p259
      %s262 = sadd.s32 %s261, 1
      %p265 = scmp.eq.s32.totalorder %s26, 1
      %p266 = scmp.ne.s32.totalorder %s261, %s263
      %p267 = scmp.eq.s32.totalorder %s26, 0
      %p268 = por %p266, %p267
      %p269 = scmp.ne.s32.totalorder %s261, %s263
      %p270 = scmp.eq.s32.totalorder %s31, 1
      %p271 = por %p269, %p270
      %p272 = scmp.ne.s32.totalorder %s263, %s264
      %p273 = scmp.eq.s32.totalorder %s31, 0
      %p274 = por %p272, %p273
      %p275 = scmp.ne.s32.totalorder %s263, %s264
      %p276 = scmp.eq.s32.totalorder %s32, 1
      %p277 = por %p275, %p276
      %p279 = scmp.ne.s32.totalorder %s264, %s278
      %p280 = scmp.eq.s32.totalorder %s32, 0
      %p281 = por %p279, %p280
      %s282 = ssub.s32 %s33, %s45
      %s283 = ssub.s32 %s34, %s41
      %s284 = sor.u32 %s282, %s283
      %p285 = scmp.eq.s32.totalorder %s284, 0
      %s287 = sadd.s32 %s286, 1
      %s288 = scalar_select %p285, %s286, %s287
      %p291 = pneg %p285
      %p292 = scmp.eq.s32.totalorder %s26, 1
      %p293 = por %p291, %p292
      %p294 = scmp.ne.s32.totalorder %s286, %s289
      %p295 = scmp.eq.s32.totalorder %s26, 0
      %p296 = por %p294, %p295
      %p297 = scmp.ne.s32.totalorder %s286, %s289
      %p298 = scmp.eq.s32.totalorder %s31, 1
      %p299 = por %p297, %p298
      %p300 = scmp.ne.s32.totalorder %s289, %s290
      %p301 = scmp.eq.s32.totalorder %s31, 0
      %p302 = por %p300, %p301
      %p303 = scmp.ne.s32.totalorder %s289, %s290
      %p304 = scmp.eq.s32.totalorder %s32, 1
      %p305 = por %p303, %p304
      %p307 = scmp.ne.s32.totalorder %s290, %s306
      %p308 = scmp.eq.s32.totalorder %s32, 0
      %p309 = por %p307, %p308
      %p310 = scmp.le.s32.totalorder 1, %s26
      %p311 = scmp.lt.s32.totalorder %s26, 3
      %p312 = pnand %p310, %p311
      %p313 = pneg %p312
      // Predicated region
      $region9: #{tpu_custom_call.1} parent=5 // pred_check
        _
      $region10: #{tpu_custom_call.1} parent=5 // pred_check_branch
        %315 = sbr.rel (%p312) target = $region12
      $region11: #{tpu_custom_call.1} parent=5 // pred_region
        %s316 = ssub.s32 %s26, 1
        // Predicated region
        $region13: #{tpu_custom_call.1} parent=11 // pred_check
          %p317 = pneg %p169
        $region14: #{tpu_custom_call.1} parent=11 // pred_check_branch
          %319 = sbr.rel (%p317) target = $region16
        $region15: #{tpu_custom_call.1} parent=11 // pred_region
          %s321 = ssub.s32 16, 16
          %322 = vsyncadd [#allocation6], %s321
          %s324 = sshll.u32 [#allocation7], 4
          %s325 = int_to_ptr.vmem [resolvable:$true] %s324
          %327 = dma.hbm_to_vmem [thread:$0]  %s4, 16, %s325, [#allocation6]
        $region16: #{tpu_custom_call.1} parent=11 // pred_fallthru
          _
        // Predicated region
        $region17: #{tpu_custom_call.1} parent=11 // pred_check
          %p328 = pneg %p190
        $region18: #{tpu_custom_call.1} parent=11 // pred_check_branch
          %330 = sbr.rel (%p328) target = $region20
        $region19: #{tpu_custom_call.1} parent=11 // pred_region
          %s332 = ssub.s32 16, 16
          %333 = vsyncadd [#allocation9], %s332
          %s335 = sshll.u32 [#allocation8], 4
          %s336 = int_to_ptr.vmem [resolvable:$true] %s335
          %338 = dma.hbm_to_vmem [thread:$0]  %s5, 16, %s336, [#allocation9]
        $region20: #{tpu_custom_call.1} parent=11 // pred_fallthru
          _
        // Predicated region
        $region21: #{tpu_custom_call.1} parent=11 // pred_check
          %p339 = pneg %p211
        $region22: #{tpu_custom_call.1} parent=11 // pred_check_branch
          %341 = sbr.rel (%p339) target = $region24
        $region23: #{tpu_custom_call.1} parent=11 // pred_region
          _
        $region24: #{tpu_custom_call.1} parent=11 // pred_fallthru
          _
        // Predicated region
        $region25: #{tpu_custom_call.1} parent=11 // pred_check
          %p342 = pneg %p232
        $region26: #{tpu_custom_call.1} parent=11 // pred_check_branch
          %344 = sbr.rel (%p342) target = $region28
        $region27: #{tpu_custom_call.1} parent=11 // pred_region
          _
        $region28: #{tpu_custom_call.1} parent=11 // pred_fallthru
          _
        // Predicated region
        $region29: #{tpu_custom_call.1} parent=11 // pred_check
          %p345 = pneg %p253
        $region30: #{tpu_custom_call.1} parent=11 // pred_check_branch
          %347 = sbr.rel (%p345) target = $region32
        $region31: #{tpu_custom_call.1} parent=11 // pred_region
          _
        $region32: #{tpu_custom_call.1} parent=11 // pred_fallthru
          _
        // Predicated region
        $region33: #{tpu_custom_call.1} parent=11 // pred_check
          %p348 = pneg %p274
        $region34: #{tpu_custom_call.1} parent=11 // pred_check_branch
          %350 = sbr.rel (%p348) target = $region36
        $region35: #{tpu_custom_call.1} parent=11 // pred_region
          _
        $region36: #{tpu_custom_call.1} parent=11 // pred_fallthru
          _
      $region12: #{tpu_custom_call.1} parent=5 // pred_fallthru
        _
      %p351 = scmp.lt.s32.totalorder %s26, 2
      // Predicated region
      $region37: #{tpu_custom_call.1} parent=5 // pred_check
        %p352 = pneg %p351
      $region38: #{tpu_custom_call.1} parent=5 // pred_check_branch
        %354 = sbr.rel (%p352) target = $region40
      $region39: #{tpu_custom_call.1} parent=5 // pred_region
        // Predicated region
        $region41: #{tpu_custom_call.1} parent=39 // pred_check
          %p355 = pneg %p60
        $region42: #{tpu_custom_call.1} parent=39 // pred_check_branch
          %357 = sbr.rel (%p355) target = $region44
        $region43: #{tpu_custom_call.1} parent=39 // pred_region
          %p358 = scmp.lt.s32.totalorder %s33, 1
          %s359 = scalar_select %p358, %s33, 1
          %p360 = scmp.lt.s32.totalorder %s34, 0
          %s361 = scalar_select %p360, %s34, 0
          %s362 = sadd.s32 %s361, %s359
          %s363 = smul.addr %s362, 8
          %s364 = scalar_lea.vmem %s0, %s363
        $region44: #{tpu_custom_call.1} parent=39 // pred_fallthru
          _
        // Predicated region
        $region45: #{tpu_custom_call.1} parent=39 // pred_check
          %p365 = pneg %p88
        $region46: #{tpu_custom_call.1} parent=39 // pred_check_branch
          %367 = sbr.rel (%p365) target = $region48
        $region47: #{tpu_custom_call.1} parent=39 // pred_region
          %s368 = sand.u32 %s78, 1
          %s369 = scalar_lea.sflag [#allocation3], %s368
          %s370 = sand.u32 %s78, 1
          %s371 = smul.addr %s370, 2
          %s372 = scalar_lea.vmem [#allocation2], %s371
          %s374 = ssub.s32 32, 32
          %375 = vsyncadd %s369, %s374
          %s376 = sadd.s32 %s34, %s33
          %s377 = smul.addr %s376, 32
          %s378 = scalar_lea.hbm %s1, %s377
          %s380 = sshll.u32 %s372, 4
          %s381 = int_to_ptr.vmem [resolvable:$true] %s380
          %383 = dma.hbm_to_vmem [thread:$0]  %s378, 32, %s381, %s369
        $region48: #{tpu_custom_call.1} parent=39 // pred_fallthru
          _
        // Predicated region
        $region49: #{tpu_custom_call.1} parent=39 // pred_check
          %p384 = pneg %p116
        $region50: #{tpu_custom_call.1} parent=39 // pred_check_branch
          %386 = sbr.rel (%p384) target = $region52
        $region51: #{tpu_custom_call.1} parent=39 // pred_region
          %p387 = scmp.lt.s32.totalorder %s33, 1
          %s388 = scalar_select %p387, %s33, 1
          %p389 = scmp.lt.s32.totalorder %s34, 0
          %s390 = scalar_select %p389, %s34, 0
          %s391 = sadd.s32 %s390, %s388
          %s392 = smul.addr %s391, 8
          %s393 = scalar_lea.vmem %s2, %s392
        $region52: #{tpu_custom_call.1} parent=39 // pred_fallthru
          _
        // Predicated region
        $region53: #{tpu_custom_call.1} parent=39 // pred_check
          %p394 = pneg %p142
        $region54: #{tpu_custom_call.1} parent=39 // pred_check_branch
          %396 = sbr.rel (%p394) target = $region56
        $region55: #{tpu_custom_call.1} parent=39 // pred_region
          %s397 = sand.u32 %s26, 1
          %s398 = scalar_lea.sflag [#allocation6], %s397
          %s399 = sand.u32 %s132, 1
          %s400 = scalar_lea.vmem [#allocation5], %s399
          %s402 = ssub.s32 16, 16
          %403 = vsyncadd %s398, %s402
          %s404 = smul.addr %s33, 16
          %s405 = scalar_lea.hbm %s3, %s404
          %s407 = sshll.u32 %s400, 4
          %s408 = int_to_ptr.vmem [resolvable:$true] %s407
          %410 = dma.hbm_to_vmem [thread:$0]  %s405, 16, %s408, %s398
        $region56: #{tpu_custom_call.1} parent=39 // pred_fallthru
          _
      $region40: #{tpu_custom_call.1} parent=5 // pred_fallthru
        _
      %p411 = scmp.le.s32.totalorder 1, %s26
      %p412 = scmp.lt.s32.totalorder %s26, 3
      %p413 = pnand %p411, %p412
      %p414 = pneg %p413
      // Predicated region
      $region57: #{tpu_custom_call.1} parent=5 // pred_check
        _
      $region58: #{tpu_custom_call.1} parent=5 // pred_check_branch
        %416 = sbr.rel (%p413) target = $region60
      $region59: #{tpu_custom_call.1} parent=5 // pred_region
        %s417 = ssub.s32 %s26, 1
        %s418 = sand.u32 %s81, 1
        %s419 = scalar_lea.sflag [#allocation3], %s418
        %s420 = sand.u32 %s81, 1
        %s421 = smul.addr %s420, 2
        %s422 = scalar_lea.vmem [#allocation2], %s421
        // Predicated region
        $region61: #{tpu_custom_call.1} parent=59 // pred_check
          %p423 = pneg %p94
        $region62: #{tpu_custom_call.1} parent=59 // pred_check_branch
          %425 = sbr.rel (%p423) target = $region64
        $region63: #{tpu_custom_call.1} parent=59 // pred_region
          %426 = dma.done %s419, 32
        $region64: #{tpu_custom_call.1} parent=59 // pred_fallthru
          _
        %s427 = sand.u32 %s31, 1
        %s428 = scalar_lea.sflag [#allocation6], %s427
        %s429 = sand.u32 %s135, 1
        %s430 = scalar_lea.vmem [#allocation5], %s429
        // Predicated region
        $region65: #{tpu_custom_call.1} parent=59 // pred_check
          %p431 = pneg %p148
        $region66: #{tpu_custom_call.1} parent=59 // pred_check_branch
          %433 = sbr.rel (%p431) target = $region68
        $region67: #{tpu_custom_call.1} parent=59 // pred_region
          %434 = dma.done %s428, 16
        $region68: #{tpu_custom_call.1} parent=59 // pred_fallthru
          _
        // Predicated region
        $region69: #{tpu_custom_call.1} parent=59 // pred_check
          %p435 = pneg %p169
        $region70: #{tpu_custom_call.1} parent=59 // pred_check_branch
          %437 = sbr.rel (%p435) target = $region72
        $region71: #{tpu_custom_call.1} parent=59 // pred_region
          %438 = dma.done [#allocation6], 16
        $region72: #{tpu_custom_call.1} parent=59 // pred_fallthru
          _
        // Predicated region
        $region73: #{tpu_custom_call.1} parent=59 // pred_check
          %p439 = pneg %p190
        $region74: #{tpu_custom_call.1} parent=59 // pred_check_branch
          %441 = sbr.rel (%p439) target = $region76
        $region75: #{tpu_custom_call.1} parent=59 // pred_region
          %442 = dma.done [#allocation9], 16
        $region76: #{tpu_custom_call.1} parent=59 // pred_fallthru
          _
        %p443 = scmp.lt.s32.totalorder %s35, 1
        %s444 = scalar_select %p443, %s35, 1
        %p445 = scmp.lt.s32.totalorder %s36, 0
        %s446 = scalar_select %p445, %s36, 0
        %s447 = sadd.s32 %s446, %s444
        %s448 = smul.addr %s447, 8
        %s449 = scalar_lea.vmem %s0, %s448
        %p450 = pneg %p66
        %p451 = pneg %p63
        %s452 = sand.u32 %s81, 1
        %s453 = scalar_lea.sflag [#allocation3], %s452
        %s454 = sand.u32 %s81, 1
        %s455 = smul.addr %s454, 2
        %s456 = scalar_lea.vmem [#allocation2], %s455
        %p457 = pneg %p94
        %p458 = pneg %p91
        %p459 = scmp.lt.s32.totalorder %s35, 1
        %s460 = scalar_select %p459, %s35, 1
        %p461 = scmp.lt.s32.totalorder %s36, 0
        %s462 = scalar_select %p461, %s36, 0
        %s463 = sadd.s32 %s462, %s460
        %s464 = smul.addr %s463, 8
        %s465 = scalar_lea.vmem %s2, %s464
        %p466 = pneg %p122
        %p467 = pneg %p119
        %s468 = sand.u32 %s31, 1
        %s469 = scalar_lea.sflag [#allocation6], %s468
        %s470 = sand.u32 %s135, 1
        %s471 = scalar_lea.vmem [#allocation5], %s470
        %p472 = pneg %p148
        %p473 = pneg %p145
        %p474 = pneg %p169
        %p475 = pneg %p166
        %p476 = pneg %p190
        %p477 = pneg %p187
        %p478 = pneg %p211
        %p479 = pneg %p208
        %p480 = pneg %p232
        %p481 = pneg %p229
        %p482 = pneg %p253
        %p483 = pneg %p250
        %p484 = pneg %p274
        %p485 = pneg %p271
        %p486 = pneg %p302
        %p487 = pneg %p299
        %s488 = sand.u32 %s289, 1
        %s489 = scalar_lea.sflag [#allocation4], %s488
        %s490 = sand.u32 %s289, 1
        %s491 = smul.addr %s490, 8
        %s492 = scalar_lea.vmem [#allocation10], %s491
        %p493 = scmp.lt.s32.totalorder %s35, 1
        %s494 = scalar_select %p493, %s35, 1
        %p495 = scmp.lt.s32.totalorder %s36, 0
        %s496 = scalar_select %p495, %s36, 0
        %s497 = sadd.s32 %s496, %s494
        %s498 = smul.addr %s497, 8
        %s499 = scalar_lea.vmem %s0, %s498
        %p500 = scmp.lt.s32.totalorder %s35, 1
        %s501 = scalar_select %p500, %s35, 1
        %p502 = scmp.lt.s32.totalorder %s36, 0
        %s503 = scalar_select %p502, %s36, 0
        %s504 = sadd.s32 %s503, %s501
        %s505 = smul.addr %s504, 8
        %s506 = scalar_lea.vmem %s2, %s505
        %v507 = vld [vmem:[%s499] sm:$0xff]
        %v508 = vld [vmem:[%s422] sm:$0x3]
        %v509 = vunpack.c.0.s8 %v508
        %v510 = vcvt.s32.f32 %v509
        %v511 = vmul.f32 %v507, %v510
        %v512 = vld [vmem:[%s506] sm:$0xff]
        %v513 = vld [vmem:[#allocation7] sm:$0x1]
        %515 = vset.pattern.permute.xlu0 0
        %516 = vperm.xlu0 %515, %v512
        %v517 = vpop.permute.xlu0 %516
        %v520 = vlaneseq
        %v521 = vshrl.u32 %v520, 7
        %v522 = vsub.s32 0, %v521
        %v523 = vrot.slane %v513, %v522
        %v525 = vmul.f32 %v517, %v523
        %v526 = vld [vmem:[#allocation8] sm:$0x1]
        %v528 = vlaneseq
        %v529 = vshrl.u32 %v528, 7
        %v530 = vsub.s32 0, %v529
        %v531 = vrot.slane %v526, %v530
        %v533 = vadd.f32 %v525, %v531
        %v534 = vand.u32 2147483647, %v533
        %vm535 = vcmp.le.f32.partialorder %v534, 0.7853982
        %vm536 = vcmp.lt.s32.totalorder %v533, 0
        %v537 = vand.u32 %v533, 2139095040
        %v538 = vshrl.u32 %v537, 23
        %v539 = vsub.s32 %v538, 127
        %v540 = vand.u32 2147483647, %v533
        %v541 = vand.u32 %v540, 8388607
        %v542 = vor.u32 %v541, 8388608
        %v543 = vsub.s32 0, %v542
        %v544 = vadd.s32 %v539, 1
        %vm545 = vcmp.gt.s32.totalorder %v544, 0
        %v546 = vsel %vm545, %v544, 0
        %v547 = vshrl.u32 %v546, 5
        %v548 = vand.u32 %v546, 31
        %v549 = vsub.s32 32, %v548
        %v550 = vshrl.u32 683565275, %v549
        %v551 = vshll.u32 683565275, %v548
        %v552 = vshrl.u32 2475754826, %v549
        %v553 = vor.u32 %v551, %v552
        %v554 = vshll.u32 2475754826, %v548
        %v555 = vshrl.u32 2131351028, %v549
        %v556 = vor.u32 %v554, %v555
        %v557 = vshll.u32 2131351028, %v548
        %v558 = vshrl.u32 2102212464, %v549
        %v559 = vor.u32 %v557, %v558
        %v560 = vshll.u32 2102212464, %v548
        %v561 = vshrl.u32 920167782, %v549
        %v562 = vor.u32 %v560, %v561
        %v563 = vshll.u32 920167782, %v548
        %v564 = vshrl.u32 1326507024, %v549
        %v565 = vor.u32 %v563, %v564
        %vm566 = vcmp.lt.s32.totalorder %v547, 1
        %vm567 = vcmp.lt.s32.totalorder %v547, 2
        %vm568 = vcmp.lt.s32.totalorder %v547, 3
        %vm569 = vcmp.lt.s32.totalorder %v547, 4
        %v570 = vsel %vm566, %v550, %v553
        %v571 = vsel %vm569, %v559, 2102212464
        %v572 = vsel %vm568, %v556, %v571
        %v573 = vsel %vm567, %v570, %v572
        %v574 = vsel %vm566, %v553, %v556
        %v575 = vsel %vm569, %v562, 920167782
        %v576 = vsel %vm568, %v559, %v575
        %v577 = vsel %vm567, %v574, %v576
        %v578 = vsel %vm566, %v556, %v559
        %v579 = vsel %vm569, %v565, 1326507024
        %v580 = vsel %vm568, %v562, %v579
        %v581 = vsel %vm567, %v578, %v580
        %v582 = vshll.u32 %v542, 8
        %v583 = vmul.u32.u64.compose %v582, %v581
        %v584 = vextract.low.u32 %v583
        %v585 = vextract.high.u32 %v583
        %v586 = vmul.u32.u64.compose %v582, %v577
        %v587 = vextract.low.u32 %v586
        %v588 = vextract.high.u32 %v586
        %v589 = vmul.u32 %v582, %v573
        %v590 = vadd.s32 %v585, %v587
        %vm591 = vc.u32 %v585, %v587
        %v592 = vadd.s32 %v588, 1
        %v593 = vsel %vm591, %v592, %v588
        %v594 = vadd.s32 %v589, %v593
        %v595 = vadd.s32 %v594, 536870912
        %v596 = vshrl.u32 %v595, 30
        %v597 = vshll.u32 %v596, 30
        %v598 = vsub.s32 %v594, %v597
        %vm599 = vcmp.lt.s32.totalorder %v598, 0
        %v600 = vsub.s32 0, %v598
        %v601 = vsel %vm599, %v600, %v598
        %v602 = vclz %v601
        %v603 = vsub.s32 %v602, 2
        %vm604 = vcmp.gt.s32.totalorder 0, %v603
        %v605 = vsel %vm604, 0, %v603
        %v606 = vsub.s32 32, %v605
        %v607 = vshll.u32 %v598, %v605
        %v608 = vshrl.u32 %v590, %v606
        %v609 = vor.u32 %v607, %v608
        %v610 = vsub.s32 4294967266, %v605
        %v611 = vadd.s32 %v610, 127
        %v612 = vshll.u32 %v611, 23
        %v613 = vor.u32 4788187, %v612
        %v614 = vand.u32 2147483647, %v613
        %v616 = vcvt.s32.f32 %v609
        %v617 = vmul.f32 %v616, %v614
        %v618 = vxor.u32 %v617, 2147483648
        %v619 = vsel %vm536, %v618, %v617
        %v620 = vsub.s32 4, %v596
        %v621 = vsel %vm536, %v620, %v596
        %v622 = vsel %vm535, %v533, %v619
        %v623 = vsel %vm535, 0, %v621
        %v624 = vcosq.f32.pop %v622
        %v625 = vsinq.f32.pop %v622
        %vm626 = vweird.f32 %v533
        %v627 = vadd.s32 %v623, 3
        %v628 = vand.u32 %v627, 3
        %vm629 = vcmp.lt.s32.totalorder %v628, 2
        %vm630 = vcmp.eq.s32.totalorder %v628, 0
        %v631 = vxor.u32 %v625, 2147483648
        %v632 = vsel %vm630, %v624, %v631
        %vm633 = vcmp.eq.s32.totalorder %v628, 2
        %v634 = vxor.u32 %v624, 2147483648
        %v635 = vsel %vm633, %v634, %v625
        %v636 = vsel %vm629, %v632, %v635
        %v637 = vsel %vm626, nan, %v636
        %v638 = vld [vmem:[%s6] sm:$0xff]
        %v639 = vld [vmem:[%s7] sm:$0xff]
        %v640 = vld [vmem:[%s7 + $0x8] sm:$0xff]
        %vm641 = vcmask 130048
        %v643 = vsel %vm641, %v637, 0
        %645 = vmatprep.subr.mxu0 0.0
        %646 = vmatpush1.msra.mxu0 %v639
        %647 = vmatprep.subr.mxu0 0.0
        %648 = vmatpush1.msra.mxu0 %v640
        %649 = vmatprep.subr.mxu0 0.0
        %650 = vmatpush1.msra.mxu0 0.0
        %651 = vmatprep.subr.mxu0 0.0
        %652 = vmatpush1.msra.mxu0 0.0
        %653 = vmatprep.subr.mxu0 0.0
        %654 = vmatpush1.msra.mxu0 0.0
        %655 = vmatprep.subr.mxu0 0.0
        %656 = vmatpush1.msra.mxu0 0.0
        %657 = vmatprep.subr.mxu0 0.0
        %658 = vmatpush1.msra.mxu0 0.0
        %659 = vmatprep.subr.mxu0 0.0
        %660 = vmatpush1.msra.mxu0 0.0
        %661 = vmatprep.subr.mxu0 0.0
        %662 = vmatpush1.msra.mxu0 0.0
        %663 = vmatprep.subr.mxu0 0.0
        %664 = vmatpush1.msra.mxu0 0.0
        %665 = vmatprep.subr.mxu0 0.0
        %666 = vmatpush1.msra.mxu0 0.0
        %667 = vmatprep.subr.mxu0 0.0
        %668 = vmatpush1.msra.mxu0 0.0
        %669 = vmatprep.subr.mxu0 0.0
        %670 = vmatpush1.msra.mxu0 0.0
        %671 = vmatprep.subr.mxu0 0.0
        %672 = vmatpush1.msra.mxu0 0.0
        %673 = vmatprep.subr.mxu0 0.0
        %674 = vmatpush1.msra.mxu0 0.0
        %675 = vmatprep.subr.mxu0 0.0
        %676 = vmatpush1.msra.mxu0 0.0
        %677 = vmatprep.subr.mxu0 0.0
        %678 = vmatpush1.msra.mxu0 0.0
        %679 = vmatprep.subr.mxu0 0.0
        %680 = vmatpush1.msra.mxu0 0.0
        %681 = vmatprep.subr.mxu0 0.0
        %682 = vmatpush1.msra.mxu0 0.0
        %683 = vmatprep.subr.mxu0 0.0
        %684 = vmatpush1.msra.mxu0 0.0
        %685 = vmatprep.subr.mxu0 0.0
        %686 = vmatpush1.msra.mxu0 0.0
        %687 = vmatprep.subr.mxu0 0.0
        %688 = vmatpush1.msra.mxu0 0.0
        %689 = vmatprep.subr.mxu0 0.0
        %690 = vmatpush1.msra.mxu0 0.0
        %691 = vmatprep.subr.mxu0 0.0
        %692 = vmatpush1.msra.mxu0 0.0
        %693 = vmatprep.subr.mxu0 0.0
        %694 = vmatpush1.msra.mxu0 0.0
        %695 = vmatprep.subr.mxu0 0.0
        %696 = vmatpush1.msra.mxu0 0.0
        %697 = vmatprep.subr.mxu0 0.0
        %698 = vmatpush1.msra.mxu0 0.0
        %699 = vmatprep.subr.mxu0 0.0
        %700 = vmatpush1.msra.mxu0 0.0
        %701 = vmatprep.subr.mxu0 0.0
        %702 = vmatpush1.msra.mxu0 0.0
        %703 = vmatprep.subr.mxu0 0.0
        %704 = vmatpush1.msra.mxu0 0.0
        %705 = vmatprep.subr.mxu0 0.0
        %706 = vmatpush1.msra.mxu0 0.0
        %707 = vmatprep.subr.mxu0 0.0
        %708 = vmatpush1.msra.mxu0 0.0
        %709 = vmatprep.mubr.f32.mxu0 0.0
        %710 = vmatmul.mubr.f32.gmra.mrb[0].mxu0 %v643
        %v711 = vpop.f32.mrb[0].mxu0
        %v712 = vadd.f32 0.0, %v711
        %v713 = vpop.f32.mrb[0].mxu0
        %714 = vdwg.mxu0
        %vm715 = vcmask 64512
        %v717 = vsel %vm715, %v511, 0
        %719 = vmatprep.subr.mxu0 0.0
        %720 = vmatpush1.msra.mxu0 %v638
        %721 = vmatprep.subr.mxu0 0.0
        %722 = vmatpush1.msra.mxu0 0.0
        %723 = vmatprep.subr.mxu0 0.0
        %724 = vmatpush1.msra.mxu0 0.0
        %725 = vmatprep.subr.mxu0 0.0
        %726 = vmatpush1.msra.mxu0 0.0
        %727 = vmatprep.subr.mxu0 0.0
        %728 = vmatpush1.msra.mxu0 0.0
        %729 = vmatprep.subr.mxu0 0.0
        %730 = vmatpush1.msra.mxu0 0.0
        %731 = vmatprep.subr.mxu0 0.0
        %732 = vmatpush1.msra.mxu0 0.0
        %733 = vmatprep.subr.mxu0 0.0
        %734 = vmatpush1.msra.mxu0 0.0
        %735 = vmatprep.subr.mxu0 0.0
        %736 = vmatpush1.msra.mxu0 0.0
        %737 = vmatprep.subr.mxu0 0.0
        %738 = vmatpush1.msra.mxu0 0.0
        %739 = vmatprep.subr.mxu0 0.0
        %740 = vmatpush1.msra.mxu0 0.0
        %741 = vmatprep.subr.mxu0 0.0
        %742 = vmatpush1.msra.mxu0 0.0
        %743 = vmatprep.subr.mxu0 0.0
        %744 = vmatpush1.msra.mxu0 0.0
        %745 = vmatprep.subr.mxu0 0.0
        %746 = vmatpush1.msra.mxu0 0.0
        %747 = vmatprep.subr.mxu0 0.0
        %748 = vmatpush1.msra.mxu0 0.0
        %749 = vmatprep.subr.mxu0 0.0
        %750 = vmatpush1.msra.mxu0 0.0
        %751 = vmatprep.subr.mxu0 0.0
        %752 = vmatpush1.msra.mxu0 0.0
        %753 = vmatprep.subr.mxu0 0.0
        %754 = vmatpush1.msra.mxu0 0.0
        %755 = vmatprep.subr.mxu0 0.0
        %756 = vmatpush1.msra.mxu0 0.0
        %757 = vmatprep.subr.mxu0 0.0
        %758 = vmatpush1.msra.mxu0 0.0
        %759 = vmatprep.subr.mxu0 0.0
        %760 = vmatpush1.msra.mxu0 0.0
        %761 = vmatprep.subr.mxu0 0.0
        %762 = vmatpush1.msra.mxu0 0.0
        %763 = vmatprep.subr.mxu0 0.0
        %764 = vmatpush1.msra.mxu0 0.0
        %765 = vmatprep.subr.mxu0 0.0
        %766 = vmatpush1.msra.mxu0 0.0
        %767 = vmatprep.subr.mxu0 0.0
        %768 = vmatpush1.msra.mxu0 0.0
        %769 = vmatprep.subr.mxu0 0.0
        %770 = vmatpush1.msra.mxu0 0.0
        %771 = vmatprep.subr.mxu0 0.0
        %772 = vmatpush1.msra.mxu0 0.0
        %773 = vmatprep.subr.mxu0 0.0
        %774 = vmatpush1.msra.mxu0 0.0
        %775 = vmatprep.subr.mxu0 0.0
        %776 = vmatpush1.msra.mxu0 0.0
        %777 = vmatprep.subr.mxu0 0.0
        %778 = vmatpush1.msra.mxu0 0.0
        %779 = vmatprep.subr.mxu0 0.0
        %780 = vmatpush1.msra.mxu0 0.0
        %781 = vmatprep.subr.mxu0 0.0
        %782 = vmatpush1.msra.mxu0 0.0
        %783 = vmatprep.mubr.f32.mxu0 0.0
        %784 = vmatmul.mubr.f32.gmra.mrb[0].mxu0 %v717
        %v785 = vpop.f32.mrb[0].mxu0
        %v786 = vadd.f32 %v712, %v785
        %v787 = vpop.f32.mrb[0].mxu0
        %788 = vdwg.mxu0
        %v789 = vld [vmem:[%s430] sm:$0x1]
        %v791 = vlaneseq
        %v792 = vshrl.u32 %v791, 7
        %v793 = vsub.s32 0, %v792
        %v794 = vrot.slane %v789, %v793
        %v796 = vadd.f32 %v786, %v794
        %v797 = vtanh.pop %v796
        %798 = vadd.xlane.f32.xlu0 %v797
        %v799 = vpop.xlane.xlu0 %798
        %v800 = vmul.f32 %v797, %v797
        %801 = vadd.xlane.f32.xlu0 %v800
        %v802 = vpop.xlane.xlu0 %801
        %v803 = vmul.f32 %v799, 0.0078125
        %v804 = vmul.f32 %v802, 0.0078125
        %v805 = vmul.f32 %v803, %v803
        %v806 = vsub.f32 %v804, %v805
        %v807 = vmax.f32 %v806, 0.0
        %v808 = vsub.f32 %v797, %v803
        %v809 = vadd.f32 %v807, 1e-12
        %v810 = vrsqrt.pop %v809
        %v811 = vmul.f32 %v808, %v810
        %v812 = vld [vmem:[%s8] sm:$0x1]
        %v814 = vlaneseq
        %v815 = vshrl.u32 %v814, 7
        %v816 = vsub.s32 0, %v815
        %v817 = vrot.slane %v812, %v816
        %v819 = vmul.f32 %v811, %v817
        %v820 = vld [vmem:[%s9] sm:$0x1]
        %v822 = vlaneseq
        %v823 = vshrl.u32 %v822, 7
        %v824 = vsub.s32 0, %v823
        %v825 = vrot.slane %v820, %v824
        %v827 = vadd.f32 %v819, %v825
        %828 = vst [vmem:[%s492] sm:$0xff] %v827
        %s829 = sand.u32 %s289, 1
        %s830 = scalar_lea.sflag [#allocation4], %s829
        %s831 = sand.u32 %s289, 1
        %s832 = smul.addr %s831, 8
        %s833 = scalar_lea.vmem [#allocation10], %s832
        // Predicated region
        $region77: #{tpu_custom_call.1} parent=59 // pred_check
          %p834 = pneg %p299
        $region78: #{tpu_custom_call.1} parent=59 // pred_check_branch
          %836 = sbr.rel (%p834) target = $region80
        $region79: #{tpu_custom_call.1} parent=59 // pred_region
          %s838 = ssub.s32 128, 128
          %839 = vsyncadd %s830, %s838
          %s840 = sadd.s32 %s36, %s35
          %s841 = smul.addr %s840, 128
          %s842 = scalar_lea.hbm %s10, %s841
          %s844 = sshll.u32 %s833, 4
          %s845 = int_to_ptr.vmem [resolvable:$true] %s844
          %847 = dma.vmem_to_hbm [thread:$0]  %s845, 128, %s842, %s830
        $region80: #{tpu_custom_call.1} parent=59 // pred_fallthru
          _
      $region60: #{tpu_custom_call.1} parent=5 // pred_fallthru
        _
      %p848 = scmp.le.s32.totalorder 2, %s26
      // Predicated region
      $region81: #{tpu_custom_call.1} parent=5 // pred_check
        %p849 = pneg %p848
      $region82: #{tpu_custom_call.1} parent=5 // pred_check_branch
        %851 = sbr.rel (%p849) target = $region84
      $region83: #{tpu_custom_call.1} parent=5 // pred_region
        %s852 = ssub.s32 %s26, 2
        // Predicated region
        $region85: #{tpu_custom_call.1} parent=83 // pred_check
          %p853 = pneg %p305
        $region86: #{tpu_custom_call.1} parent=83 // pred_check_branch
          %855 = sbr.rel (%p853) target = $region88
        $region87: #{tpu_custom_call.1} parent=83 // pred_region
          %s856 = sand.u32 %s290, 1
          %s857 = scalar_lea.sflag [#allocation4], %s856
          %s858 = sand.u32 %s290, 1
          %s859 = smul.addr %s858, 8
          %s860 = scalar_lea.vmem [#allocation10], %s859
          %861 = dma.done %s857, 128
        $region88: #{tpu_custom_call.1} parent=83 // pred_fallthru
          _
      $region84: #{tpu_custom_call.1} parent=5 // pred_fallthru
        _
    $region6: #{tpu_custom_call.1} parent=1 // loop_footer
      %s30 = sadd.s32 1, %s26
    $region7: #{tpu_custom_call.1} parent=1 // loop_footer_branch
      %25 = sbr.rel target = $region3
    $region8: #{tpu_custom_call.1} parent=1 // loop_exit
      _
    %862 = vsyncpa [#allocation3], 1
    %s863 = scalar_lea.sflag [#allocation3], 1
    %864 = vsyncpa %s863, 1
    %865 = vsyncpa [#allocation6], 1
    %s866 = scalar_lea.sflag [#allocation6], 1
    %867 = vsyncpa %s866, 1
    %868 = vsyncpa [#allocation9], 1
    %869 = vsyncpa [#allocation4], 1
    %s870 = scalar_lea.sflag [#allocation4], 1
    %871 = vsyncpa %s870, 1

</llo_original>
